<compile_context>
chip_gen: v5e
topology: v5e:2x2
jax: 0.10.0
libtpu: 0.0.40
codegen_flags: <defaults>
</compile_context>

<pallas_src>
import functools

import jax
import jax.numpy as jnp
from jax.experimental import pallas as pl
from jax.experimental.pallas import tpu as pltpu

EPS = 1e-5  # nn.BatchNorm1d default eps


def _round_up(x, m):
    return (x + m - 1) // m * m


def _vmem_limit_bytes():
    cap = 64 * 1024 * 1024  # conservative fallback (v7x physical VMEM)
    try:
        info = pltpu.get_tpu_info()
        cap = int(getattr(info, "vmem_capacity_bytes", cap))
    except Exception:
        pass
    # Leave headroom for Mosaic internal scratch / double-buffering.
    return int(cap * 0.8)


# ---------------------------------------------------------------------------
# Fused path: conv(k=1) + ReLU + BN stats + normalize in one sweep.
# Grid = (2 * nt,):  steps [0, nt) = phase 1, steps [nt, 2*nt) = phase 2.
# ---------------------------------------------------------------------------
def _fused_kernel(x_ref, w_ref, g_ref, b_ref, o_ref,
                  y_sc, sum_acc, sq_acc, scale_sc, shift_sc,
                  *, nt, tile_n, n_valid, ragged):
    i = pl.program_id(0)

    @pl.when(i == 0)
    def _():
        sum_acc[...] = jnp.zeros_like(sum_acc)
        sq_acc[...] = jnp.zeros_like(sq_acc)

    # Phase 1: matmul + ReLU, stash tile in VMEM, accumulate BN statistics.
    @pl.when(i < nt)
    def _():
        y = jnp.dot(x_ref[...], w_ref[...], preferred_element_type=jnp.float32)
        y = jnp.maximum(y, 0.0)                          # ReLU
        if ragged:
            row = (jax.lax.broadcasted_iota(jnp.int32, (tile_n, 1), 0)
                   + i * tile_n)
            y = jnp.where(row < n_valid, y, 0.0)         # mask padded rows
        start = pl.multiple_of(i * tile_n, tile_n)
        y_sc[pl.ds(start, tile_n), :] = y.astype(y_sc.dtype)
        sum_acc[...] += jnp.sum(y, axis=0, keepdims=True)
        sq_acc[...] += jnp.sum(y * y, axis=0, keepdims=True)

    # Fold BN statistics into per-channel scale/shift once (tiny, EUP rsqrt).
    @pl.when(i == nt - 1)
    def _():
        inv_n = jnp.float32(1.0 / n_valid)
        mean = sum_acc[...] * inv_n
        var = jnp.maximum(sq_acc[...] * inv_n - mean * mean, 0.0)
        inv_std = jax.lax.rsqrt(var + EPS)
        scale = g_ref[...] * inv_std
        scale_sc[...] = scale
        shift_sc[...] = b_ref[...] - mean * scale

    # Phase 2: normalize from the VMEM-resident activation, stream output out.
    @pl.when(i >= nt)
    def _():
        start = pl.multiple_of((i - nt) * tile_n, tile_n)
        y = y_sc[pl.ds(start, tile_n), :].astype(jnp.float32)
        o_ref[...] = (y * scale_sc[...] + shift_sc[...]).astype(o_ref.dtype)


# ---------------------------------------------------------------------------
# Fallback pass 1: conv(k=1) matmul + ReLU + BN-stat accumulation -> HBM y.
# ---------------------------------------------------------------------------
def _conv_relu_stats_kernel(x_ref, w_ref, g_ref, b_ref,
                            y_ref, scale_ref, shift_ref,
                            sum_acc, sq_acc, *, tile_n, n_valid, ragged):
    i = pl.program_id(0)

    @pl.when(i == 0)
    def _():
        sum_acc[...] = jnp.zeros_like(sum_acc)
        sq_acc[...] = jnp.zeros_like(sq_acc)

    y = jnp.dot(x_ref[...], w_ref[...], preferred_element_type=jnp.float32)
    y = jnp.maximum(y, 0.0)
    if ragged:
        row = jax.lax.broadcasted_iota(jnp.int32, (tile_n, 1), 0) + i * tile_n
        y = jnp.where(row < n_valid, y, 0.0)
    y_ref[...] = y.astype(y_ref.dtype)
    sum_acc[...] += jnp.sum(y, axis=0, keepdims=True)
    sq_acc[...] += jnp.sum(y * y, axis=0, keepdims=True)

    @pl.when(i == pl.num_programs(0) - 1)
    def _():
        inv_n = jnp.float32(1.0 / n_valid)
        mean = sum_acc[...] * inv_n
        var = jnp.maximum(sq_acc[...] * inv_n - mean * mean, 0.0)
        inv_std = jax.lax.rsqrt(var + EPS)
        scale = g_ref[...] * inv_std
        scale_ref[...] = scale
        shift_ref[...] = b_ref[...] - mean * scale


# ---------------------------------------------------------------------------
# Fallback pass 2: folded BN normalize (2 VPU ops / element).
# ---------------------------------------------------------------------------
def _normalize_kernel(y_ref, scale_ref, shift_ref, o_ref):
    y = y_ref[...].astype(jnp.float32)
    o_ref[...] = (y * scale_ref[...] + shift_ref[...]).astype(o_ref.dtype)


def conv1d_relu_bn(x, conv_weight, gamma, beta, *, tile_n=1024):
    """x: (B, T, C_in); conv_weight: (C_out, C_in, 1) as in nn.Conv1d.weight."""
    B, T, C_in = x.shape
    C_out = conv_weight.shape[0]
    N = B * T
    out_dtype = x.dtype

    c_out_p = _round_up(C_out, 128)          # lane-dense output channels
    tile_n = min(tile_n, _round_up(N, 8))    # keep row tiles a multiple of 8
    nt = pl.cdiv(N, tile_n)
    ragged = (N % tile_n) != 0

    # No host-side padding / copy of x: it streams straight from HBM.
    x2d = x.reshape(N, C_in)

    # Weight (C_in, C_out_p) — pad only the output-channel (lane) dim.
    w = conv_weight.reshape(C_out, C_in).T.astype(x.dtype)
    w_p = jnp.pad(w, ((0, 0), (0, c_out_p - C_out)))
    g_p = jnp.pad(gamma.astype(jnp.float32).reshape(1, C_out),
                  ((0, 0), (0, c_out_p - C_out)))
    b_p = jnp.pad(beta.astype(jnp.float32).reshape(1, C_out),
                  ((0, 0), (0, c_out_p - C_out)))

    vmem_limit = _vmem_limit_bytes()

    def _fused_bytes(y_dtype):
        y_bytes = nt * tile_n * c_out_p * jnp.dtype(y_dtype).itemsize
        stream = 2 * tile_n * (C_in * jnp.dtype(x.dtype).itemsize
                               + c_out_p * jnp.dtype(out_dtype).itemsize)
        weights = 2 * C_in * c_out_p * jnp.dtype(w_p.dtype).itemsize
        return y_bytes + stream + weights + 8 * c_out_p * 4

    if x.dtype == jnp.float32:
        scratch_candidates = (jnp.float32, jnp.bfloat16)
    else:
        scratch_candidates = (x.dtype,)
    y_scratch_dtype = None
    for cand in scratch_candidates:
        if _fused_bytes(cand) <= vmem_limit - (4 << 20):
            y_scratch_dtype = cand
            break

    if y_scratch_dtype is not None:
        # ---- Fused single sweep: the activation never leaves VMEM ----------
        out_flat = pl.pallas_call(
            functools.partial(_fused_kernel, nt=nt, tile_n=tile_n,
                              n_valid=N, ragged=ragged),
            grid=(2 * nt,),
            in_specs=[
                pl.BlockSpec((tile_n, C_in),
                             lambda i: (jnp.minimum(i, nt - 1), 0)),
                pl.BlockSpec((C_in, c_out_p), lambda i: (0, 0)),   # weight resident
                pl.BlockSpec((1, c_out_p), lambda i: (0, 0)),      # gamma resident
                pl.BlockSpec((1, c_out_p), lambda i: (0, 0)),      # beta resident
            ],
            out_specs=pl.BlockSpec((tile_n, c_out_p),
                                   lambda i: (jnp.maximum(i - nt, 0), 0)),
            out_shape=jax.ShapeDtypeStruct((N, c_out_p), out_dtype),
            scratch_shapes=[
                pltpu.VMEM((nt * tile_n, c_out_p), y_scratch_dtype),  # resident y
                pltpu.VMEM((1, c_out_p), jnp.float32),                # sum
                pltpu.VMEM((1, c_out_p), jnp.float32),                # sum of squares
                pltpu.VMEM((1, c_out_p), jnp.float32),                # folded scale
                pltpu.VMEM((1, c_out_p), jnp.float32),                # folded shift
            ],
            compiler_params=pltpu.CompilerParams(
                dimension_semantics=("arbitrary",),   # sequential two-phase sweep
                vmem_limit_bytes=vmem_limit,
            ),
        )(x2d, w_p, g_p, b_p)
    else:
        # ---- Fallback: two passes, bf16 HBM intermediate --------------------
        y_dtype = jnp.bfloat16
        grid = (nt,)
        y_p, scale, shift = pl.pallas_call(
            functools.partial(_conv_relu_stats_kernel, tile_n=tile_n,
                              n_valid=N, ragged=ragged),
            grid=grid,
            in_specs=[
                pl.BlockSpec((tile_n, C_in), lambda i: (i, 0)),
                pl.BlockSpec((C_in, c_out_p), lambda i: (0, 0)),
                pl.BlockSpec((1, c_out_p), lambda i: (0, 0)),
                pl.BlockSpec((1, c_out_p), lambda i: (0, 0)),
            ],
            out_specs=(
                pl.BlockSpec((tile_n, c_out_p), lambda i: (i, 0)),
                pl.BlockSpec((1, c_out_p), lambda i: (0, 0)),
                pl.BlockSpec((1, c_out_p), lambda i: (0, 0)),
            ),
            out_shape=(
                jax.ShapeDtypeStruct((N, c_out_p), y_dtype),
                jax.ShapeDtypeStruct((1, c_out_p), jnp.float32),
                jax.ShapeDtypeStruct((1, c_out_p), jnp.float32),
            ),
            scratch_shapes=[pltpu.VMEM((1, c_out_p), jnp.float32),
                            pltpu.VMEM((1, c_out_p), jnp.float32)],
            compiler_params=pltpu.CompilerParams(
                dimension_semantics=("arbitrary",),   # global reduction over N
                vmem_limit_bytes=vmem_limit,
            ),
        )(x2d, w_p, g_p, b_p)

        alias = {0: 0} if jnp.dtype(y_dtype) == jnp.dtype(out_dtype) else {}
        out_flat = pl.pallas_call(
            _normalize_kernel,
            grid=grid,
            in_specs=[
                pl.BlockSpec((tile_n, c_out_p), lambda i: (i, 0)),
                pl.BlockSpec((1, c_out_p), lambda i: (0, 0)),
                pl.BlockSpec((1, c_out_p), lambda i: (0, 0)),
            ],
            out_specs=pl.BlockSpec((tile_n, c_out_p), lambda i: (i, 0)),
            out_shape=jax.ShapeDtypeStruct((N, c_out_p), out_dtype),
            input_output_aliases=alias,
            compiler_params=pltpu.CompilerParams(
                dimension_semantics=("parallel",),    # independent tiles (megacore)
                vmem_limit_bytes=vmem_limit,
            ),
        )(y_p, scale, shift)

    return out_flat[:, :C_out].reshape(B, T, C_out)


def reference(x, conv_weight, gamma, beta):
    B, T, C_in = x.shape
    C_out = conv_weight.shape[0]
    y = jnp.einsum("btc,oc->bto", x.astype(jnp.float32),
                   conv_weight.reshape(C_out, C_in).astype(jnp.float32))
    y = jnp.maximum(y, 0.0)
    y2 = y.reshape(B * T, C_out)
    mean = jnp.mean(y2, axis=0)
    var = jnp.mean((y2 - mean) ** 2, axis=0)
    yn = (y2 - mean) / jnp.sqrt(var + EPS)
    return (gamma * yn + beta).reshape(B, T, C_out).astype(x.dtype)


if __name__ == "__main__":
    B, T, C_in, C_out = 2, 16, 4, 8

    key = jax.random.PRNGKey(0)
    kx, kw = jax.random.split(key)
    x = jax.random.normal(kx, (B, T, C_in), dtype=jnp.float32)
    # Conv1d weight, shape (C_out, C_in, kernel_size=1).
    conv_weight = jax.random.normal(kw, (C_out, C_in, 1), dtype=jnp.float32) * 0.1
    # nn.BatchNorm1d default affine params.
    gamma = jnp.ones((C_out,), dtype=jnp.float32)
    beta = jnp.zeros((C_out,), dtype=jnp.float32)

    out = conv1d_relu_bn(x, conv_weight, gamma, beta)
    out = jax.block_until_ready(out)

    ref = reference(x, conv_weight, gamma, beta)
    assert out.shape == (B, T, C_out)
    assert jnp.allclose(out, ref, atol=1e-4, rtol=1e-4), "mismatch vs reference"
    print("KERNEL_OK")
</pallas_src>

<mosaic_0001>
module attributes {stable_mosaic.version = 11 : i64} {
  func.func @_fused_kernel(%arg0: i32, %arg1: memref<32x4xf32, #tpu.memory_space<vmem>>, %arg2: memref<4x128xf32, #tpu.memory_space<vmem>>, %arg3: memref<1x128xf32, #tpu.memory_space<vmem>>, %arg4: memref<1x128xf32, #tpu.memory_space<vmem>>, %arg5: memref<32x128xf32, #tpu.memory_space<vmem>>, %arg6: memref<32x128xf32, #tpu.memory_space<vmem>>, %arg7: memref<1x128xf32, #tpu.memory_space<vmem>>, %arg8: memref<1x128xf32, #tpu.memory_space<vmem>>, %arg9: memref<1x128xf32, #tpu.memory_space<vmem>>, %arg10: memref<1x128xf32, #tpu.memory_space<vmem>>) attributes {dimension_semantics = [#tpu.dimension_semantics<arbitrary>], iteration_bounds = array<i64: 2>, scalar_prefetch = 0 : i64, scratch_operands = 5 : i64, tpu.core_type = #tpu.core_type<tc>, window_params = [{transform_indices = @transform_0, window_bounds = array<i64: 32, 4>}, {pipeline_mode = #tpu.pipeline_mode<synchronous>, transform_indices = @transform_1, window_bounds = array<i64: 4, 128>}, {pipeline_mode = #tpu.pipeline_mode<synchronous>, transform_indices = @transform_2, window_bounds = array<i64: 1, 128>}, {pipeline_mode = #tpu.pipeline_mode<synchronous>, transform_indices = @transform_3, window_bounds = array<i64: 1, 128>}, {transform_indices = @transform_4, window_bounds = array<i64: 32, 128>}]} {
    %c0_i32 = arith.constant 0 : i32
    %0 = arith.cmpi eq, %arg0, %c0_i32 : i32
    %1 = arith.extui %0 : i1 to i32
    %c0_i32_0 = arith.constant 0 : i32
    %2 = arith.cmpi ne, %1, %c0_i32_0 : i32
    scf.if %2 {
      %cst = arith.constant 0.000000e+00 : f32
      %12 = vector.broadcast %cst : f32 to vector<1x128xf32>
      %c0 = arith.constant 0 : index
      %c0_6 = arith.constant 0 : index
      %13 = vector.load %arg7[%c0, %c0_6] : memref<1x128xf32, #tpu.memory_space<vmem>>, vector<1x128xf32>
      tpu.vector_store %arg7[%c0, %c0_6], %12 {strides = array<i32>} : memref<1x128xf32, #tpu.memory_space<vmem>>, vector<1x128xf32>,
      %cst_7 = arith.constant 0.000000e+00 : f32
      %14 = vector.broadcast %cst_7 : f32 to vector<1x128xf32>
      %c0_8 = arith.constant 0 : index
      %c0_9 = arith.constant 0 : index
      %15 = vector.load %arg8[%c0_8, %c0_9] : memref<1x128xf32, #tpu.memory_space<vmem>>, vector<1x128xf32>
      tpu.vector_store %arg8[%c0_8, %c0_9], %14 {strides = array<i32>} : memref<1x128xf32, #tpu.memory_space<vmem>>, vector<1x128xf32>,
    } else {
    }
    %c1_i32 = arith.constant 1 : i32
    %3 = arith.cmpi slt, %arg0, %c1_i32 : i32
    %4 = arith.extui %3 : i1 to i32
    %c0_i32_1 = arith.constant 0 : i32
    %5 = arith.cmpi ne, %4, %c0_i32_1 : i32
    scf.if %5 {
      %c0 = arith.constant 0 : index
      %c0_6 = arith.constant 0 : index
      %12 = vector.load %arg1[%c0, %c0_6] : memref<32x4xf32, #tpu.memory_space<vmem>>, vector<32x4xf32>
      %c0_7 = arith.constant 0 : index
      %c0_8 = arith.constant 0 : index
      %13 = vector.load %arg2[%c0_7, %c0_8] : memref<4x128xf32, #tpu.memory_space<vmem>>, vector<4x128xf32>
      %cst = arith.constant dense<0.000000e+00> : vector<32x128xf32>
      %14 = tpu.matmul %12, %13, %cst {dimension_numbers = #tpu.dot_dimension_numbers<[1], [0], [0], [1], [0, 0, 1, 1], [], []>} : vector<32x4xf32>, vector<4x128xf32>, vector<32x128xf32> -> vector<32x128xf32>
      %cst_9 = arith.constant 0.000000e+00 : f32
      %15 = vector.broadcast %cst_9 : f32 to vector<32x128xf32>
      %16 = arith.maximumf %14, %15 : vector<32x128xf32>
      %c32_i32 = arith.constant 32 : i32
      %17 = arith.muli %arg0, %c32_i32 : i32
      %18 = tpu.assume_multiple %17, 32 : i32
      %19 = arith.index_cast %18 : i32 to index
      %c0_10 = arith.constant 0 : index
      %20 = vector.load %arg6[%19, %c0_10] : memref<32x128xf32, #tpu.memory_space<vmem>>, vector<32x128xf32>
      tpu.vector_store %arg6[%19, %c0_10], %16 {strides = array<i32>} : memref<32x128xf32, #tpu.memory_space<vmem>>, vector<32x128xf32>,
      %c0_11 = arith.constant 0 : index
      %c0_12 = arith.constant 0 : index
      %21 = vector.load %arg7[%c0_11, %c0_12] : memref<1x128xf32, #tpu.memory_space<vmem>>, vector<1x128xf32>
      %cst_13 = arith.constant dense<0.000000e+00> : vector<128xf32>
      %22 = vector.multi_reduction <add>, %16, %cst_13 [0] : vector<32x128xf32> to vector<128xf32>
      %23 = vector.shape_cast %22 : vector<128xf32> to vector<1x128xf32>
      %24 = arith.addf %21, %23 : vector<1x128xf32>
      %c0_14 = arith.constant 0 : index
      %c0_15 = arith.constant 0 : index
      %25 = vector.load %arg7[%c0_14, %c0_15] : memref<1x128xf32, #tpu.memory_space<vmem>>, vector<1x128xf32>
      tpu.vector_store %arg7[%c0_14, %c0_15], %24 {strides = array<i32>} : memref<1x128xf32, #tpu.memory_space<vmem>>, vector<1x128xf32>,
      %c0_16 = arith.constant 0 : index
      %c0_17 = arith.constant 0 : index
      %26 = vector.load %arg8[%c0_16, %c0_17] : memref<1x128xf32, #tpu.memory_space<vmem>>, vector<1x128xf32>
      %27 = arith.mulf %16, %16 : vector<32x128xf32>
      %cst_18 = arith.constant dense<0.000000e+00> : vector<128xf32>
      %28 = vector.multi_reduction <add>, %27, %cst_18 [0] : vector<32x128xf32> to vector<128xf32>
      %29 = vector.shape_cast %28 : vector<128xf32> to vector<1x128xf32>
      %30 = arith.addf %26, %29 : vector<1x128xf32>
      %c0_19 = arith.constant 0 : index
      %c0_20 = arith.constant 0 : index
      %31 = vector.load %arg8[%c0_19, %c0_20] : memref<1x128xf32, #tpu.memory_space<vmem>>, vector<1x128xf32>
      tpu.vector_store %arg8[%c0_19, %c0_20], %30 {strides = array<i32>} : memref<1x128xf32, #tpu.memory_space<vmem>>, vector<1x128xf32>,
    } else {
    }
    %c0_i32_2 = arith.constant 0 : i32
    %6 = arith.cmpi eq, %arg0, %c0_i32_2 : i32
    %7 = arith.extui %6 : i1 to i32
    %c0_i32_3 = arith.constant 0 : i32
    %8 = arith.cmpi ne, %7, %c0_i32_3 : i32
    scf.if %8 {
      %c0 = arith.constant 0 : index
      %c0_6 = arith.constant 0 : index
      %12 = vector.load %arg7[%c0, %c0_6] : memref<1x128xf32, #tpu.memory_space<vmem>>, vector<1x128xf32>
      %cst = arith.constant 3.125000e-02 : f32
      %13 = vector.broadcast %cst : f32 to vector<1x128xf32>
      %14 = arith.mulf %12, %13 : vector<1x128xf32>
      %c0_7 = arith.constant 0 : index
      %c0_8 = arith.constant 0 : index
      %15 = vector.load %arg8[%c0_7, %c0_8] : memref<1x128xf32, #tpu.memory_space<vmem>>, vector<1x128xf32>
      %cst_9 = arith.constant 3.125000e-02 : f32
      %16 = vector.broadcast %cst_9 : f32 to vector<1x128xf32>
      %17 = arith.mulf %15, %16 : vector<1x128xf32>
      %18 = arith.mulf %14, %14 : vector<1x128xf32>
      %19 = arith.subf %17, %18 : vector<1x128xf32>
      %cst_10 = arith.constant 0.000000e+00 : f32
      %20 = vector.broadcast %cst_10 : f32 to vector<1x128xf32>
      %21 = arith.maximumf %19, %20 : vector<1x128xf32>
      %cst_11 = arith.constant 9.99999974E-6 : f32
      %22 = vector.broadcast %cst_11 : f32 to vector<1x128xf32>
      %23 = arith.addf %21, %22 : vector<1x128xf32>
      %24 = math.rsqrt %23 : vector<1x128xf32>
      %c0_12 = arith.constant 0 : index
      %c0_13 = arith.constant 0 : index
      %25 = vector.load %arg3[%c0_12, %c0_13] : memref<1x128xf32, #tpu.memory_space<vmem>>, vector<1x128xf32>
      %26 = arith.mulf %25, %24 : vector<1x128xf32>
      %c0_14 = arith.constant 0 : index
      %c0_15 = arith.constant 0 : index
      %27 = vector.load %arg9[%c0_14, %c0_15] : memref<1x128xf32, #tpu.memory_space<vmem>>, vector<1x128xf32>
      tpu.vector_store %arg9[%c0_14, %c0_15], %26 {strides = array<i32>} : memref<1x128xf32, #tpu.memory_space<vmem>>, vector<1x128xf32>,
      %c0_16 = arith.constant 0 : index
      %c0_17 = arith.constant 0 : index
      %28 = vector.load %arg4[%c0_16, %c0_17] : memref<1x128xf32, #tpu.memory_space<vmem>>, vector<1x128xf32>
      %29 = arith.mulf %14, %26 : vector<1x128xf32>
      %30 = arith.subf %28, %29 : vector<1x128xf32>
      %c0_18 = arith.constant 0 : index
      %c0_19 = arith.constant 0 : index
      %31 = vector.load %arg10[%c0_18, %c0_19] : memref<1x128xf32, #tpu.memory_space<vmem>>, vector<1x128xf32>
      tpu.vector_store %arg10[%c0_18, %c0_19], %30 {strides = array<i32>} : memref<1x128xf32, #tpu.memory_space<vmem>>, vector<1x128xf32>,
    } else {
    }
    %c1_i32_4 = arith.constant 1 : i32
    %9 = arith.cmpi sge, %arg0, %c1_i32_4 : i32
    %10 = arith.extui %9 : i1 to i32
    %c0_i32_5 = arith.constant 0 : i32
    %11 = arith.cmpi ne, %10, %c0_i32_5 : i32
    scf.if %11 {
      %c1_i32_6 = arith.constant 1 : i32
      %12 = arith.subi %arg0, %c1_i32_6 : i32
      %c32_i32 = arith.constant 32 : i32
      %13 = arith.muli %12, %c32_i32 : i32
      %14 = tpu.assume_multiple %13, 32 : i32
      %15 = arith.index_cast %14 : i32 to index
      %c0 = arith.constant 0 : index
      %16 = vector.load %arg6[%15, %c0] : memref<32x128xf32, #tpu.memory_space<vmem>>, vector<32x128xf32>
      %c0_7 = arith.constant 0 : index
      %c0_8 = arith.constant 0 : index
      %17 = vector.load %arg9[%c0_7, %c0_8] : memref<1x128xf32, #tpu.memory_space<vmem>>, vector<1x128xf32>
      %18 = vector.broadcast %17 : vector<1x128xf32> to vector<32x128xf32>
      %19 = arith.mulf %16, %18 : vector<32x128xf32>
      %c0_9 = arith.constant 0 : index
      %c0_10 = arith.constant 0 : index
      %20 = vector.load %arg10[%c0_9, %c0_10] : memref<1x128xf32, #tpu.memory_space<vmem>>, vector<1x128xf32>
      %21 = vector.broadcast %20 : vector<1x128xf32> to vector<32x128xf32>
      %22 = arith.addf %19, %21 : vector<32x128xf32>
      %c0_11 = arith.constant 0 : index
      %c0_12 = arith.constant 0 : index
      %23 = vector.load %arg5[%c0_11, %c0_12] : memref<32x128xf32, #tpu.memory_space<vmem>>, vector<32x128xf32>
      tpu.vector_store %arg5[%c0_11, %c0_12], %22 {strides = array<i32>} : memref<32x128xf32, #tpu.memory_space<vmem>>, vector<32x128xf32>,
    } else {
    }
    return
  }
  func.func @transform_0(%arg0: i32) -> (i32, i32) {
    %c0_i32 = arith.constant 0 : i32
    %0 = arith.minsi %arg0, %c0_i32 : i32
    %c0_i32_0 = arith.constant 0 : i32
    %c0_i32_1 = arith.constant 0 : i32
    return %0, %c0_i32_0 : i32, i32
  }
  func.func @transform_1(%arg0: i32) -> (i32, i32) {
    %c0_i32 = arith.constant 0 : i32
    %c0_i32_0 = arith.constant 0 : i32
    %c0_i32_1 = arith.constant 0 : i32
    return %c0_i32, %c0_i32_0 : i32, i32
  }
  func.func @transform_2(%arg0: i32) -> (i32, i32) {
    %c0_i32 = arith.constant 0 : i32
    %c0_i32_0 = arith.constant 0 : i32
    %c0_i32_1 = arith.constant 0 : i32
    return %c0_i32, %c0_i32_0 : i32, i32
  }
  func.func @transform_3(%arg0: i32) -> (i32, i32) {
    %c0_i32 = arith.constant 0 : i32
    %c0_i32_0 = arith.constant 0 : i32
    %c0_i32_1 = arith.constant 0 : i32
    return %c0_i32, %c0_i32_0 : i32, i32
  }
  func.func @transform_4(%arg0: i32) -> (i32, i32) {
    %c1_i32 = arith.constant 1 : i32
    %0 = arith.subi %arg0, %c1_i32 : i32
    %c0_i32 = arith.constant 0 : i32
    %1 = arith.maxsi %0, %c0_i32 : i32
    %c0_i32_0 = arith.constant 0 : i32
    %c0_i32_1 = arith.constant 0 : i32
    return %1, %c0_i32_0 : i32, i32
  }
}

</mosaic_0001>

<llo_original>
// kernel: tpu_custom_call.1
$region0: #{tpu_custom_call.1}
  #allocation0 [shape = 'u32[]', space=smem, size = 0x4, offset = 0x4, fixed_abs, tag = 'smem constant byte address 0x4 - core index']
  #allocation1 [shape = 'u32[72,128]{1,0:T(1,128)}', space=vmem, size = 0x9000, scoped, tag = 'internal scratch']
  #allocation2 [shape = 'f32[32,128]{1,0:T(8,128)}', space=vmem, size = 0x4000, scoped, tag = 'scratch operand']
  #allocation3 [shape = 'f32[1,128]{1,0:T(1,128)}', space=vmem, size = 0x200, scoped, tag = 'scratch operand']
  #allocation4 [shape = 'f32[1,128]{1,0:T(1,128)}', space=vmem, size = 0x200, scoped, tag = 'scratch operand']
  #allocation5 [shape = 'f32[1,128]{1,0:T(1,128)}', space=vmem, size = 0x200, scoped, tag = 'scratch operand']
  #allocation6 [shape = 'f32[1,128]{1,0:T(1,128)}', space=vmem, size = 0x200, scoped, tag = 'scratch operand']
  %s0 = inlined_call_operand.vmem [shape: f32[32,4], index: 0, kind: input, shape index: {}]
  %s1 = inlined_call_operand.vmem [shape: f32[4,128], index: 1, kind: input, shape index: {}]
  %s2 = inlined_call_operand.vmem [shape: f32[1,128], index: 2, kind: input, shape index: {}]
  %s3 = inlined_call_operand.vmem [shape: f32[1,128], index: 3, kind: input, shape index: {}]
  %s4 = inlined_call_operand.hbm [shape: f32[32,128], index: 4, kind: output, shape index: {}]
  %s5 = sld [smem:[#allocation0]]
  $region65: #{tpu_custom_call.1} parent=0
    _
  %s7 = ssub.s32 1, %s5
  %s8 = scalar_select 0, %s7, %s5
  $region1: #{tpu_custom_call.1} parent=0
    #allocation7 [shape = 'u8[32768]{0}', space=vmem, size = 0x8000, scoped, tag = 'output window, operand 0']
    #allocation8 [shape = 's32[2]{0}', space=sflag, size = 0x8, scoped, tag = 'scoped memory for tpu_custom_call.1']
    %9 = vsyncpa [#allocation8], 0
    %s10 = scalar_lea.sflag [#allocation8], 1
    %11 = vsyncpa %s10, 0
    loop: start=0, step=1, limit=4
    $region2: #{tpu_custom_call.1} parent=1 // loop_pre_header
      _
    $region3: #{tpu_custom_call.1} parent=1 // loop_header
      %s13 = sphi 0, %s17
      %p14 = scmp.ge.s32.totalorder %s13, 4
      %s27 = sphi 0, %s29
      %s30 = sphi 0, %s27
      %s31 = sphi 0, %s30
      %s47 = sphi 0, %s31
      %s51 = sphi 0, %s51
      %s53 = sphi 0, %s51
      %s54 = sphi 0, %s53
      %s68 = sphi 0, %s54
      %s72 = sphi 0, %s72
      %s74 = sphi 0, %s72
      %s75 = sphi 0, %s74
      %s89 = sphi 0, %s75
      %s93 = sphi 0, %s93
      %s95 = sphi 0, %s93
      %s96 = sphi 0, %s95
      %s110 = sphi 0, %s96
      %s122 = sphi 0, %s124
      %s125 = sphi 0, %s122
      %s126 = sphi 0, %s125
      %s142 = sphi 0, %s126
    $region4: #{tpu_custom_call.1} parent=1 // loop_header_branch
      %16 = sbr.rel (%p14) target = $region8
    $region5: #{tpu_custom_call.1} parent=1 // loop_body
      %s18 = ssub.s32 %s13, 1
      %s19 = ssub.s32 %s13, 2
      %s20 = sadd.s32 %s13, 1
      %p21 = scmp.lt.s32.totalorder %s13, 0
      %s22 = scalar_select %p21, %s13, 0
      %p23 = scmp.lt.s32.totalorder %s20, 0
      %s24 = scalar_select %p23, %s20, 0
      %s25 = ssub.s32 %s22, %s24
      %p26 = scmp.eq.s32.totalorder %s25, 0
      %s28 = sadd.s32 %s27, 1
      %s29 = scalar_select %p26, %s27, %s28
      %p32 = pneg %p26
      %p33 = scmp.eq.s32.totalorder %s13, 1
      %p34 = por %p32, %p33
      %p35 = scmp.ne.s32.totalorder %s27, %s30
      %p36 = scmp.eq.s32.totalorder %s13, 0
      %p37 = por %p35, %p36
      %p38 = scmp.ne.s32.totalorder %s27, %s30
      %p39 = scmp.eq.s32.totalorder %s18, 1
      %p40 = por %p38, %p39
      %p41 = scmp.ne.s32.totalorder %s30, %s31
      %p42 = scmp.eq.s32.totalorder %s18, 0
      %p43 = por %p41, %p42
      %p44 = scmp.ne.s32.totalorder %s30, %s31
      %p45 = scmp.eq.s32.totalorder %s19, 1
      %p46 = por %p44, %p45
      %p48 = scmp.ne.s32.totalorder %s31, %s47
      %p49 = scmp.eq.s32.totalorder %s19, 0
      %p50 = por %p48, %p49
      %s52 = sadd.s32 %s51, 1
      %p55 = scmp.eq.s32.totalorder %s13, 1
      %p56 = scmp.ne.s32.totalorder %s51, %s53
      %p57 = scmp.eq.s32.totalorder %s13, 0
      %p58 = por %p56, %p57
      %p59 = scmp.ne.s32.totalorder %s51, %s53
      %p60 = scmp.eq.s32.totalorder %s18, 1
      %p61 = por %p59, %p60
      %p62 = scmp.ne.s32.totalorder %s53, %s54
      %p63 = scmp.eq.s32.totalorder %s18, 0
      %p64 = por %p62, %p63
      %p65 = scmp.ne.s32.totalorder %s53, %s54
      %p66 = scmp.eq.s32.totalorder %s19, 1
      %p67 = por %p65, %p66
      %p69 = scmp.ne.s32.totalorder %s54, %s68
      %p70 = scmp.eq.s32.totalorder %s19, 0
      %p71 = por %p69, %p70
      %s73 = sadd.s32 %s72, 1
      %p76 = scmp.eq.s32.totalorder %s13, 1
      %p77 = scmp.ne.s32.totalorder %s72, %s74
      %p78 = scmp.eq.s32.totalorder %s13, 0
      %p79 = por %p77, %p78
      %p80 = scmp.ne.s32.totalorder %s72, %s74
      %p81 = scmp.eq.s32.totalorder %s18, 1
      %p82 = por %p80, %p81
      %p83 = scmp.ne.s32.totalorder %s74, %s75
      %p84 = scmp.eq.s32.totalorder %s18, 0
      %p85 = por %p83, %p84
      %p86 = scmp.ne.s32.totalorder %s74, %s75
      %p87 = scmp.eq.s32.totalorder %s19, 1
      %p88 = por %p86, %p87
      %p90 = scmp.ne.s32.totalorder %s75, %s89
      %p91 = scmp.eq.s32.totalorder %s19, 0
      %p92 = por %p90, %p91
      %s94 = sadd.s32 %s93, 1
      %p97 = scmp.eq.s32.totalorder %s13, 1
      %p98 = scmp.ne.s32.totalorder %s93, %s95
      %p99 = scmp.eq.s32.totalorder %s13, 0
      %p100 = por %p98, %p99
      %p101 = scmp.ne.s32.totalorder %s93, %s95
      %p102 = scmp.eq.s32.totalorder %s18, 1
      %p103 = por %p101, %p102
      %p104 = scmp.ne.s32.totalorder %s95, %s96
      %p105 = scmp.eq.s32.totalorder %s18, 0
      %p106 = por %p104, %p105
      %p107 = scmp.ne.s32.totalorder %s95, %s96
      %p108 = scmp.eq.s32.totalorder %s19, 1
      %p109 = por %p107, %p108
      %p111 = scmp.ne.s32.totalorder %s96, %s110
      %p112 = scmp.eq.s32.totalorder %s19, 0
      %p113 = por %p111, %p112
      %s114 = ssub.s32 %s13, 1
      %p115 = scmp.gt.s32.totalorder %s114, 0
      %s116 = scalar_select %p115, %s114, 0
      %s117 = ssub.s32 %s20, 1
      %p118 = scmp.gt.s32.totalorder %s117, 0
      %s119 = scalar_select %p118, %s117, 0
      %s120 = ssub.s32 %s116, %s119
      %p121 = scmp.eq.s32.totalorder %s120, 0
      %s123 = sadd.s32 %s122, 1
      %s124 = scalar_select %p121, %s122, %s123
      %p127 = pneg %p121
      %p128 = scmp.eq.s32.totalorder %s13, 1
      %p129 = por %p127, %p128
      %p130 = scmp.ne.s32.totalorder %s122, %s125
      %p131 = scmp.eq.s32.totalorder %s13, 0
      %p132 = por %p130, %p131
      %p133 = scmp.ne.s32.totalorder %s122, %s125
      %p134 = scmp.eq.s32.totalorder %s18, 1
      %p135 = por %p133, %p134
      %p136 = scmp.ne.s32.totalorder %s125, %s126
      %p137 = scmp.eq.s32.totalorder %s18, 0
      %p138 = por %p136, %p137
      %p139 = scmp.ne.s32.totalorder %s125, %s126
      %p140 = scmp.eq.s32.totalorder %s19, 1
      %p141 = por %p139, %p140
      %p143 = scmp.ne.s32.totalorder %s126, %s142
      %p144 = scmp.eq.s32.totalorder %s19, 0
      %p145 = por %p143, %p144
      %p146 = scmp.le.s32.totalorder 1, %s13
      %p147 = scmp.lt.s32.totalorder %s13, 3
      %p148 = pnand %p146, %p147
      %p149 = pneg %p148
      // Predicated region
      $region9: #{tpu_custom_call.1} parent=5 // pred_check
        _
      $region10: #{tpu_custom_call.1} parent=5 // pred_check_branch
        %151 = sbr.rel (%p148) target = $region12
      $region11: #{tpu_custom_call.1} parent=5 // pred_region
        %s152 = ssub.s32 %s13, 1
        // Predicated region
        $region13: #{tpu_custom_call.1} parent=11 // pred_check
          %p153 = pneg %p64
        $region14: #{tpu_custom_call.1} parent=11 // pred_check_branch
          %155 = sbr.rel (%p153) target = $region16
        $region15: #{tpu_custom_call.1} parent=11 // pred_region
          _
        $region16: #{tpu_custom_call.1} parent=11 // pred_fallthru
          _
        // Predicated region
        $region17: #{tpu_custom_call.1} parent=11 // pred_check
          %p156 = pneg %p85
        $region18: #{tpu_custom_call.1} parent=11 // pred_check_branch
          %158 = sbr.rel (%p156) target = $region20
        $region19: #{tpu_custom_call.1} parent=11 // pred_region
          _
        $region20: #{tpu_custom_call.1} parent=11 // pred_fallthru
          _
        // Predicated region
        $region21: #{tpu_custom_call.1} parent=11 // pred_check
          %p159 = pneg %p106
        $region22: #{tpu_custom_call.1} parent=11 // pred_check_branch
          %161 = sbr.rel (%p159) target = $region24
        $region23: #{tpu_custom_call.1} parent=11 // pred_region
          _
        $region24: #{tpu_custom_call.1} parent=11 // pred_fallthru
          _
      $region12: #{tpu_custom_call.1} parent=5 // pred_fallthru
        _
      %p162 = scmp.lt.s32.totalorder %s13, 2
      // Predicated region
      $region25: #{tpu_custom_call.1} parent=5 // pred_check
        %p163 = pneg %p162
      $region26: #{tpu_custom_call.1} parent=5 // pred_check_branch
        %165 = sbr.rel (%p163) target = $region28
      $region27: #{tpu_custom_call.1} parent=5 // pred_region
        // Predicated region
        $region29: #{tpu_custom_call.1} parent=27 // pred_check
          %p166 = pneg %p37
        $region30: #{tpu_custom_call.1} parent=27 // pred_check_branch
          %168 = sbr.rel (%p166) target = $region32
        $region31: #{tpu_custom_call.1} parent=27 // pred_region
          %p169 = scmp.lt.s32.totalorder %s13, 0
          %s170 = scalar_select %p169, %s13, 0
          %s171 = smul.u32 4, %s170
          %p172 = scmp.lt.s32.totalorder %s171, 3
          %s173 = scalar_select %p172, %s171, 3
          %s174 = smul.addr %s173, 8
          %s175 = scalar_lea.vmem %s0, %s174
          %p176 = scmp.lt.s32.totalorder %s13, 0
          %s177 = scalar_select %p176, %s13, 0
          %s178 = smul.u32 4, %s177
        $region32: #{tpu_custom_call.1} parent=27 // pred_fallthru
          _
      $region28: #{tpu_custom_call.1} parent=5 // pred_fallthru
        _
      %p179 = scmp.le.s32.totalorder 1, %s13
      %p180 = scmp.lt.s32.totalorder %s13, 3
      %p181 = pnand %p179, %p180
      %p182 = pneg %p181
      // Predicated region
      $region33: #{tpu_custom_call.1} parent=5 // pred_check
        _
      $region34: #{tpu_custom_call.1} parent=5 // pred_check_branch
        %184 = sbr.rel (%p181) target = $region36
      $region35: #{tpu_custom_call.1} parent=5 // pred_region
        %s185 = ssub.s32 %s13, 1
        %p186 = scmp.lt.s32.totalorder %s18, 0
        %s187 = scalar_select %p186, %s18, 0
        %s188 = smul.u32 4, %s187
        %p189 = scmp.lt.s32.totalorder %s188, 3
        %s190 = scalar_select %p189, %s188, 3
        %s191 = smul.addr %s190, 8
        %s192 = scalar_lea.vmem %s0, %s191
        %p193 = pneg %p43
        %p194 = pneg %p40
        %p195 = pneg %p64
        %p196 = pneg %p61
        %p197 = pneg %p85
        %p198 = pneg %p82
        %p199 = pneg %p106
        %p200 = pneg %p103
        %p201 = pneg %p138
        %p202 = pneg %p135
        %s203 = sand.u32 %s125, 1
        %s204 = scalar_lea.sflag [#allocation8], %s203
        %s205 = sand.u32 %s125, 1
        %s206 = smul.addr %s205, 32
        %s207 = scalar_lea.vmem [#allocation7], %s206
        %p208 = scmp.lt.s32.totalorder %s18, 0
        %s209 = scalar_select %p208, %s18, 0
        %s210 = smul.u32 4, %s209
        %p211 = scmp.lt.s32.totalorder %s210, 3
        %s212 = scalar_select %p211, %s210, 3
        %s213 = smul.addr %s212, 8
        %s214 = scalar_lea.vmem %s0, %s213
        %p215 = scmp.lt.s32.totalorder %s18, 0
        %s216 = scalar_select %p215, %s18, 0
        %s217 = smul.u32 4, %s216
        %s218 = ssub.s32 %s18, 1
        %p219 = scmp.gt.s32.totalorder %s218, 0
        %s220 = scalar_select %p219, %s218, 0
        %s221 = smul.u32 4, %s220
        %p222 = scmp.eq.s32.totalorder %s18, 0
        // Predicated region
        $region37: #{tpu_custom_call.1} parent=35 // pred_check
          %p223 = pneg %p222
        $region38: #{tpu_custom_call.1} parent=35 // pred_check_branch
          %225 = sbr.rel (%p223) target = $region40
        $region39: #{tpu_custom_call.1} parent=35 // pred_region
          %226 = vst [vmem:[#allocation3] sm:$0x1] 0.0
          %227 = vst [vmem:[#allocation4] sm:$0x1] 0.0
        $region40: #{tpu_custom_call.1} parent=35 // pred_fallthru
          _
        %p228 = scmp.lt.s32.totalorder %s18, 1
        // Predicated region
        $region41: #{tpu_custom_call.1} parent=35 // pred_check
          %p229 = pneg %p228
        $region42: #{tpu_custom_call.1} parent=35 // pred_check_branch
          %231 = sbr.rel (%p229) target = $region44
        $region43: #{tpu_custom_call.1} parent=35 // pred_region
          %v232 = vld [vmem:[%s214] sm:$0xff]
          %v233 = vld [vmem:[%s214 + $0x8] sm:$0xff]
          %v234 = vld [vmem:[%s214 + $0x10] sm:$0xff]
          %v235 = vld [vmem:[%s214 + $0x18] sm:$0xff]
          %v236 = vld [vmem:[%s1] sm:$0xf]
          %vm237 = vcmask 31744
          %v239 = vsel %vm237, %v232, 0
          %v242 = vsel %vm237, %v233, 0
          %v245 = vsel %vm237, %v234, 0
          %v248 = vsel %vm237, %v235, 0
          %vm250 = vcmask 1043456
          %v252 = vsel %vm250, %v236, 0
          %254 = vmatpush.msra.mxu0 0.0
          %255 = vmatpush.msra.mxu0 0.0
          %256 = vmatpush.msra.mxu0 0.0
          %257 = vmatpush.msra.mxu0 0.0
          %258 = vmatpush.msra.mxu0 0.0
          %259 = vmatpush.msra.mxu0 0.0
          %260 = vmatpush.msra.mxu0 0.0
          %261 = vmatpush.msra.mxu0 0.0
          %262 = vmatpush.msra.mxu0 0.0
          %263 = vmatpush.msra.mxu0 0.0
          %264 = vmatpush.msra.mxu0 0.0
          %265 = vmatpush.msra.mxu0 0.0
          %266 = vmatpush.msra.mxu0 0.0
          %267 = vmatpush.msra.mxu0 0.0
          %268 = vmatpush.msra.mxu0 0.0
          %269 = vmatpush.msra.mxu0 %v252
          %270 = vmatmul.f32.gmra.mxu0 %v239
          %v271 = vpop.f32.mrf.mxu0
          %v272 = vadd.f32 0.0, %v271
          %273 = vmatmul.f32.gmra.mxu0 %v242
          %v274 = vpop.f32.mrf.mxu0
          %v275 = vadd.f32 0.0, %v274
          %276 = vmatmul.f32.gmra.mxu0 %v245
          %v277 = vpop.f32.mrf.mxu0
          %v278 = vadd.f32 0.0, %v277
          %279 = vmatmul.f32.gmra.mxu0 %v248
          %v280 = vpop.f32.mrf.mxu0
          %v281 = vadd.f32 0.0, %v280
          %282 = vdwg.mxu0
          %v283 = vmax.f32 %v272, 0.0
          %v284 = vmax.f32 %v275, 0.0
          %v285 = vmax.f32 %v278, 0.0
          %v286 = vmax.f32 %v281, 0.0
          %s287 = smul.u32 %s18, 32
          %s288 = scalar_lea.vmem [#allocation2], %s287
          %289 = vst [vmem:[%s288] sm:$0xff] %v283
          %290 = vst [vmem:[%s288 + $0x8] sm:$0xff] %v284
          %291 = vst [vmem:[%s288 + $0x10] sm:$0xff] %v285
          %292 = vst [vmem:[%s288 + $0x18] sm:$0xff] %v286
          %v293 = vld [vmem:[#allocation3] sm:$0x1]
          %v294 = vadd.f32 %v283, %v284
          %v295 = vadd.f32 %v294, %v285
          %v296 = vadd.f32 %v295, %v286
          %v297 = vrot.slane %v296, 4
          %v298 = vadd.f32 %v296, %v297
          %v299 = vrot.slane %v298, 2
          %v300 = vadd.f32 %v298, %v299
          %v301 = vrot.slane %v300, 1
          %v302 = vadd.f32 %v300, %v301
          %v303 = vadd.f32 %v293, %v302
          %304 = vst [vmem:[#allocation3] sm:$0x1] %v303
          %v305 = vld [vmem:[#allocation4] sm:$0x1]
          %v306 = vmul.f32 %v283, %v283
          %v307 = vmul.f32 %v284, %v284
          %v308 = vmul.f32 %v285, %v285
          %v309 = vmul.f32 %v286, %v286
          %v310 = vadd.f32 %v306, %v307
          %v311 = vadd.f32 %v310, %v308
          %v312 = vadd.f32 %v311, %v309
          %v313 = vrot.slane %v312, 4
          %v314 = vadd.f32 %v312, %v313
          %v315 = vrot.slane %v314, 2
          %v316 = vadd.f32 %v314, %v315
          %v317 = vrot.slane %v316, 1
          %v318 = vadd.f32 %v316, %v317
          %v319 = vadd.f32 %v305, %v318
          %320 = vst [vmem:[#allocation4] sm:$0x1] %v319
        $region44: #{tpu_custom_call.1} parent=35 // pred_fallthru
          _
        // Predicated region
        $region45: #{tpu_custom_call.1} parent=35 // pred_check
          %p321 = pneg %p222
        $region46: #{tpu_custom_call.1} parent=35 // pred_check_branch
          %323 = sbr.rel (%p321) target = $region48
        $region47: #{tpu_custom_call.1} parent=35 // pred_region
          %v324 = vld [vmem:[#allocation3] sm:$0x1]
          %v325 = vmul.f32 %v324, 0.03125
          %v326 = vld [vmem:[#allocation4] sm:$0x1]
          %v327 = vmul.f32 %v326, 0.03125
          %v328 = vmul.f32 %v325, %v325
          %v329 = vsub.f32 %v327, %v328
          %v330 = vmax.f32 %v329, 0.0
          %v331 = vadd.f32 %v330, 1e-05
          %v332 = vrsqrt.pop %v331
          %v333 = vmul.f32 %v332, %v331
          %v334 = vmul.f32 %v333, %v332
          %v335 = vmul.f32 0.5, %v334
          %v336 = vsub.f32 1.5, %v335
          %v337 = vmul.f32 %v332, %v336
          %vm338 = vweird.f32 %v331
          %vm339 = vweird.f32 %v332
          %vm340 = vmor %vm338, %vm339
          %v341 = vsel %vm340, %v332, %v337
          %v342 = vld [vmem:[%s2] sm:$0x1]
          %v343 = vmul.f32 %v342, %v341
          %344 = vst [vmem:[#allocation5] sm:$0x1] %v343
          %v345 = vld [vmem:[%s3] sm:$0x1]
          %v346 = vmul.f32 %v325, %v343
          %v347 = vsub.f32 %v345, %v346
          %348 = vst [vmem:[#allocation6] sm:$0x1] %v347
        $region48: #{tpu_custom_call.1} parent=35 // pred_fallthru
          _
        %p349 = scmp.ge.s32.totalorder %s18, 1
        // Predicated region
        $region49: #{tpu_custom_call.1} parent=35 // pred_check
          %p350 = pneg %p349
        $region50: #{tpu_custom_call.1} parent=35 // pred_check_branch
          %352 = sbr.rel (%p350) target = $region52
        $region51: #{tpu_custom_call.1} parent=35 // pred_region
          %s353 = ssub.s32 %s18, 1
          %s354 = smul.u32 %s353, 32
          %s355 = scalar_lea.vmem [#allocation2], %s354
          %v356 = vld [vmem:[%s355] sm:$0xff]
          %v357 = vld [vmem:[%s355 + $0x8] sm:$0xff]
          %v358 = vld [vmem:[%s355 + $0x10] sm:$0xff]
          %v359 = vld [vmem:[%s355 + $0x18] sm:$0xff]
          %v360 = vld [vmem:[#allocation5] sm:$0x1]
          %v362 = vperm.slane %v360, 0
          %v364 = vmul.f32 %v356, %v362
          %v365 = vmul.f32 %v357, %v362
          %v366 = vmul.f32 %v358, %v362
          %v367 = vmul.f32 %v359, %v362
          %v368 = vld [vmem:[#allocation6] sm:$0x1]
          %v370 = vperm.slane %v368, 0
          %v372 = vadd.f32 %v364, %v370
          %v373 = vadd.f32 %v365, %v370
          %v374 = vadd.f32 %v366, %v370
          %v375 = vadd.f32 %v367, %v370
          %376 = vst [vmem:[%s207] sm:$0xff] %v372
          %377 = vst [vmem:[%s207 + $0x8] sm:$0xff] %v373
          %378 = vst [vmem:[%s207 + $0x10] sm:$0xff] %v374
          %379 = vst [vmem:[%s207 + $0x18] sm:$0xff] %v375
        $region52: #{tpu_custom_call.1} parent=35 // pred_fallthru
          _
        %s380 = sand.u32 %s125, 1
        %s381 = scalar_lea.sflag [#allocation8], %s380
        %s382 = sand.u32 %s125, 1
        %s383 = smul.addr %s382, 32
        %s384 = scalar_lea.vmem [#allocation7], %s383
        // Predicated region
        $region53: #{tpu_custom_call.1} parent=35 // pred_check
          %p385 = pneg %p135
        $region54: #{tpu_custom_call.1} parent=35 // pred_check_branch
          %387 = sbr.rel (%p385) target = $region56
        $region55: #{tpu_custom_call.1} parent=35 // pred_region
          %s388 = ssub.s32 %s18, 1
          %p389 = scmp.gt.s32.totalorder %s388, 0
          %s390 = scalar_select %p389, %s388, 0
          %s391 = smul.u32 4, %s390
          %393 = vsyncadd %s381, 0
          %s394 = smul.addr %s391, 8
          %s395 = scalar_lea.hbm %s4, %s394
          %s396 = sshll.u32 %s384, 4
          %s397 = int_to_ptr.vmem [resolvable:$true] %s396
          %s398 = sshll.u32 %s395, 4
          %s399 = int_to_ptr.hbm [resolvable:$true] %s398
          %404 = dma.vmem_to_hbm [thread:$0]  %s397, 512, %s399, %s381, 128, 128, 8
        $region56: #{tpu_custom_call.1} parent=35 // pred_fallthru
          _
      $region36: #{tpu_custom_call.1} parent=5 // pred_fallthru
        _
      %p405 = scmp.le.s32.totalorder 2, %s13
      // Predicated region
      $region57: #{tpu_custom_call.1} parent=5 // pred_check
        %p406 = pneg %p405
      $region58: #{tpu_custom_call.1} parent=5 // pred_check_branch
        %408 = sbr.rel (%p406) target = $region60
      $region59: #{tpu_custom_call.1} parent=5 // pred_region
        %s409 = ssub.s32 %s13, 2
        // Predicated region
        $region61: #{tpu_custom_call.1} parent=59 // pred_check
          %p410 = pneg %p141
        $region62: #{tpu_custom_call.1} parent=59 // pred_check_branch
          %412 = sbr.rel (%p410) target = $region64
        $region63: #{tpu_custom_call.1} parent=59 // pred_region
          %s413 = sand.u32 %s126, 1
          %s414 = scalar_lea.sflag [#allocation8], %s413
          %s415 = sand.u32 %s126, 1
          %s416 = smul.addr %s415, 32
          %s417 = scalar_lea.vmem [#allocation7], %s416
          %419 = dma.done %s414, 512
        $region64: #{tpu_custom_call.1} parent=59 // pred_fallthru
          _
      $region60: #{tpu_custom_call.1} parent=5 // pred_fallthru
        _
    $region6: #{tpu_custom_call.1} parent=1 // loop_footer
      %s17 = sadd.s32 1, %s13
    $region7: #{tpu_custom_call.1} parent=1 // loop_footer_branch
      %12 = sbr.rel target = $region3
    $region8: #{tpu_custom_call.1} parent=1 // loop_exit
      _
    %420 = vsyncpa [#allocation8], 1
    %s421 = scalar_lea.sflag [#allocation8], 1
    %422 = vsyncpa %s421, 1

</llo_original>
